<compile_context>
chip_gen: v7x
topology: tpu7x:2x2x1
jax: 0.10.0
libtpu: 0.0.40
codegen_flags: <defaults>
</compile_context>

<pallas_src>
import functools

import jax
import jax.numpy as jnp
from jax.experimental import pallas as pl
from jax.experimental.pallas import tpu as pltpu


# ----------------------- Pallas kernel -----------------------

def _unet_down_kernel(x_ref, w_ref, o_ref, *, bn, slope, eps, ho, wo, kdim, tc):
    """Fused stride-2 4x4 conv + InstanceNorm + LeakyReLU for one sample /
    one output-channel tile.

    x_ref: (1, ho+1, wo+1, 4*Cin)  bf16   phase-split padded input,
                                          channel order = (pi, pj, cin)
    w_ref: (4, 4*Cin, tc)          bf16   weights grouped by shift s = 2*di+dj,
                                          K order = (pi, pj, cin)
    o_ref: (1, ho, wo, tc)         f32    NHWC output tile (tc multiple of 128)
    """
    acc = jnp.zeros((ho * wo, tc), jnp.float32)
    # 4 shifts (di, dj); each contracts K = 4*Cin (both kernel parities fused).
    for s in range(4):
        di, dj = s // 2, s % 2
        patch = x_ref[0, di:di + ho, dj:dj + wo, :]            # (ho, wo, 4*Cin)
        a = patch.reshape(ho * wo, kdim)
        acc += jnp.dot(a, w_ref[s], preferred_element_type=jnp.float32)

    y = acc                                                    # (ho*wo, tc) f32
    if bn:
        # InstanceNorm2d(affine=False): per-channel stats over H*W, biased
        # variance, eps=1e-5.  One-pass (sum / sumsq) form, clamped at 0.
        mean = jnp.mean(y, axis=0, keepdims=True)
        meansq = jnp.mean(y * y, axis=0, keepdims=True)
        var = jnp.maximum(meansq - mean * mean, 0.0)
        y = (y - mean) * jax.lax.rsqrt(var + eps)
    # LeakyReLU(slope)
    y = jnp.where(y >= 0, y, slope * y)
    # TODO(synk): Dropout uses eval-mode semantics (identity); default p=0.0.
    o_ref[...] = y.reshape(1, ho, wo, tc).astype(o_ref.dtype)


# ----------------------- wrapper -----------------------

def _round_up(v, m):
    return (v + m - 1) // m * m


def unet_down(x, w, *, bn=True, slope=0.2, eps=1e-5,
              compute_dtype=jnp.bfloat16, out_dtype=jnp.float32):
    """x: (N, Cin, H, W) f32, w: (Cout, Cin, 4, 4) f32 -> (N, Cout, H/2, W/2)."""
    n, cin, h, wd = x.shape
    cout = w.shape[0]
    assert h % 2 == 0 and wd % 2 == 0, "stride-2 conv expects even H, W"
    ho, wo = h // 2, wd // 2
    kdim = 4 * cin

    # Lane-dense output channels: pad Cout up to a multiple of 128.
    cout_p = _round_up(cout, 128)
    tc = 128 if cout_p > 128 else cout_p

    # ---- input relayout: NCHW -> padded, phase-split (N, ho+1, wo+1, 4*Cin)
    # (pad + one 6-D transpose; same total size as the input, no im2col).
    xp = jnp.pad(x, ((0, 0), (0, 0), (1, 1), (1, 1)))          # (N, Cin, H+2, W+2)
    xp = xp.reshape(n, cin, ho + 1, 2, wo + 1, 2)              # [.., r, pi, c, pj]
    xp = jnp.transpose(xp, (0, 2, 4, 3, 5, 1))                 # (N, r, c, pi, pj, Cin)
    xph = xp.reshape(n, ho + 1, wo + 1, kdim).astype(compute_dtype)

    # ---- weight relayout: (Cout, Cin, 4, 4) -> (4 shifts, 4*Cin, Coutp)
    wp = jnp.pad(w, ((0, cout_p - cout), (0, 0), (0, 0), (0, 0)))
    wp = wp.reshape(cout_p, cin, 2, 2, 2, 2)                   # [.., di, pi, dj, pj]
    wp = jnp.transpose(wp, (2, 4, 3, 5, 1, 0))                 # (di, dj, pi, pj, Cin, Coutp)
    wk = wp.reshape(4, kdim, cout_p).astype(compute_dtype)

    # ---- grid: keep the larger of {weight tile, activation tile} resident
    # across the inner axis.
    x_tile_bytes = (ho + 1) * (wo + 1) * kdim * 2
    w_tile_bytes = 4 * kdim * tc * 2
    o_tile_bytes = ho * wo * tc * 4
    n_ct = cout_p // tc
    if w_tile_bytes > x_tile_bytes:
        grid = (n_ct, n)
        x_map = lambda c, b: (b, 0, 0, 0)
        w_map = lambda c, b: (0, 0, c)
        o_map = lambda c, b: (b, 0, 0, c)
    else:
        grid = (n, n_ct)
        x_map = lambda b, c: (b, 0, 0, 0)
        w_map = lambda b, c: (0, 0, c)
        o_map = lambda b, c: (b, 0, 0, c)

    # ---- VMEM budget (double-buffered blocks + f32 accumulator + epilogue).
    acc_bytes = ho * wo * tc * 4
    vmem_need = 2 * (x_tile_bytes + w_tile_bytes + o_tile_bytes) + 2 * acc_bytes + (1 << 20)
    vmem_limit = int(min(max(vmem_need, 32 << 20), 128 << 20))

    cost = pl.CostEstimate(
        flops=2 * n * ho * wo * cout_p * 16 * cin,
        transcendentals=(n * cout_p) if bn else 0,
        bytes_accessed=xph.size * 2 + wk.size * 2 + n * ho * wo * cout_p * 4,
    )

    kern = functools.partial(_unet_down_kernel, bn=bn, slope=slope, eps=eps,
                             ho=ho, wo=wo, kdim=kdim, tc=tc)

    out_nhwc = pl.pallas_call(
        kern,
        out_shape=jax.ShapeDtypeStruct((n, ho, wo, cout_p), out_dtype),
        grid_spec=pltpu.PrefetchScalarGridSpec(
            num_scalar_prefetch=0,
            grid=grid,
            in_specs=[
                pl.BlockSpec((1, ho + 1, wo + 1, kdim), x_map),
                pl.BlockSpec((4, kdim, tc), w_map),
            ],
            out_specs=pl.BlockSpec((1, ho, wo, tc), o_map),
        ),
        compiler_params=pltpu.CompilerParams(
            dimension_semantics=("parallel", "parallel"),
            vmem_limit_bytes=vmem_limit),
        cost_estimate=cost,
    )(xph, wk)

    # Slice off channel padding; NHWC -> NCHW only at the module boundary.
    return jnp.transpose(out_nhwc[..., :cout], (0, 3, 1, 2))


# ----------------------- pure-JAX reference -----------------------

def unet_down_reference(x, w, *, bn=True, slope=0.2, eps=1e-5):
    y = jax.lax.conv_general_dilated(
        x, w, window_strides=(2, 2), padding=((1, 1), (1, 1)),
        dimension_numbers=("NCHW", "OIHW", "NCHW"))
    if bn:
        mean = jnp.mean(y, axis=(2, 3), keepdims=True)
        var = jnp.mean((y - mean) ** 2, axis=(2, 3), keepdims=True)
        y = (y - mean) * jax.lax.rsqrt(var + eps)
    return jnp.where(y >= 0, y, slope * y)


# ----------------------- demo / self-check -----------------------

if __name__ == "__main__":
    key = jax.random.PRNGKey(0)
    kx, kw = jax.random.split(key)

    n, cin, cout, hw = 2, 4, 8, 16
    x = jax.random.normal(kx, (n, cin, hw, hw), jnp.float32)
    w = 0.1 * jax.random.normal(kw, (cout, cin, 4, 4), jnp.float32)

    # Default UNetDown: bn=True, LeakyReLU(0.2), dropout=0 (identity).
    fwd = jax.jit(functools.partial(unet_down, bn=True, slope=0.2))
    y = jax.block_until_ready(fwd(x, w))
    assert y.shape == (n, cout, hw // 2, hw // 2), y.shape
    assert bool(jnp.all(jnp.isfinite(y)))

    y_ref = unet_down_reference(x, w, bn=True, slope=0.2)
    err = float(jnp.max(jnp.abs(y - y_ref)))
    assert err < 5e-2, f"bn=True max abs err {err}"

    # Also exercise the bn=False variant (e.g. UNetDown(..., bn=False)).
    fwd_nb = jax.jit(functools.partial(unet_down, bn=False, slope=0.2))
    y2 = jax.block_until_ready(fwd_nb(x, w))
    y2_ref = unet_down_reference(x, w, bn=False, slope=0.2)
    err2 = float(jnp.max(jnp.abs(y2 - y2_ref)))
    assert err2 < 5e-2, f"bn=False max abs err {err2}"

    print("KERNEL_OK")
</pallas_src>

<mosaic_0001>
module attributes {stable_mosaic.version = 11 : i64} {
  func.func @_unet_down_kernel(%arg0: i32, %arg1: i32, %arg2: memref<1x9x9x16xbf16, #tpu.memory_space<vmem>>, %arg3: memref<4x16x128xbf16, #tpu.memory_space<vmem>>, %arg4: memref<1x8x8x128xf32, #tpu.memory_space<vmem>>) attributes {dimension_semantics = [#tpu.dimension_semantics<parallel>, #tpu.dimension_semantics<parallel>], iteration_bounds = array<i64: 1, 2>, scalar_prefetch = 0 : i64, scratch_operands = 0 : i64, tpu.core_type = #tpu.core_type<tc>, window_params = [{transform_indices = @transform_0, window_bounds = array<i64: 1, 9, 9, 16>}, {transform_indices = @transform_1, window_bounds = array<i64: 4, 16, 128>}, {transform_indices = @transform_2, window_bounds = array<i64: 1, 8, 8, 128>}]} {
    %cst = arith.constant 0.000000e+00 : f32
    %0 = vector.broadcast %cst : f32 to vector<64x128xf32>
    %c0 = arith.constant 0 : index
    %c0_0 = arith.constant 0 : index
    %c0_1 = arith.constant 0 : index
    %c0_2 = arith.constant 0 : index
    %1 = vector.load %arg2[%c0, %c0_0, %c0_1, %c0_2] : memref<1x9x9x16xbf16, #tpu.memory_space<vmem>>, vector<1x8x8x16xbf16>
    %2 = vector.shape_cast %1 : vector<1x8x8x16xbf16> to vector<8x8x16xbf16>
    %3 = vector.shape_cast %2 : vector<8x8x16xbf16> to vector<64x16xbf16>
    %c0_3 = arith.constant 0 : index
    %c0_4 = arith.constant 0 : index
    %c0_5 = arith.constant 0 : index
    %4 = vector.load %arg3[%c0_3, %c0_4, %c0_5] : memref<4x16x128xbf16, #tpu.memory_space<vmem>>, vector<1x16x128xbf16>
    %5 = vector.shape_cast %4 : vector<1x16x128xbf16> to vector<16x128xbf16>
    %cst_6 = arith.constant dense<0.000000e+00> : vector<64x128xf32>
    %6 = tpu.matmul %3, %5, %cst_6 {dimension_numbers = #tpu.dot_dimension_numbers<[1], [0], [0], [1], [0, 0, 1, 1], [], []>} : vector<64x16xbf16>, vector<16x128xbf16>, vector<64x128xf32> -> vector<64x128xf32>
    %7 = arith.addf %0, %6 : vector<64x128xf32>
    %c0_7 = arith.constant 0 : index
    %c0_8 = arith.constant 0 : index
    %c1 = arith.constant 1 : index
    %c0_9 = arith.constant 0 : index
    %8 = vector.load %arg2[%c0_7, %c0_8, %c1, %c0_9] : memref<1x9x9x16xbf16, #tpu.memory_space<vmem>>, vector<1x8x8x16xbf16>
    %9 = vector.shape_cast %8 : vector<1x8x8x16xbf16> to vector<8x8x16xbf16>
    %10 = vector.shape_cast %9 : vector<8x8x16xbf16> to vector<64x16xbf16>
    %c1_10 = arith.constant 1 : index
    %c0_11 = arith.constant 0 : index
    %c0_12 = arith.constant 0 : index
    %11 = vector.load %arg3[%c1_10, %c0_11, %c0_12] : memref<4x16x128xbf16, #tpu.memory_space<vmem>>, vector<1x16x128xbf16>
    %12 = vector.shape_cast %11 : vector<1x16x128xbf16> to vector<16x128xbf16>
    %cst_13 = arith.constant dense<0.000000e+00> : vector<64x128xf32>
    %13 = tpu.matmul %10, %12, %cst_13 {dimension_numbers = #tpu.dot_dimension_numbers<[1], [0], [0], [1], [0, 0, 1, 1], [], []>} : vector<64x16xbf16>, vector<16x128xbf16>, vector<64x128xf32> -> vector<64x128xf32>
    %14 = arith.addf %7, %13 : vector<64x128xf32>
    %c0_14 = arith.constant 0 : index
    %c1_15 = arith.constant 1 : index
    %c0_16 = arith.constant 0 : index
    %c0_17 = arith.constant 0 : index
    %15 = vector.load %arg2[%c0_14, %c1_15, %c0_16, %c0_17] : memref<1x9x9x16xbf16, #tpu.memory_space<vmem>>, vector<1x8x8x16xbf16>
    %16 = vector.shape_cast %15 : vector<1x8x8x16xbf16> to vector<8x8x16xbf16>
    %17 = vector.shape_cast %16 : vector<8x8x16xbf16> to vector<64x16xbf16>
    %c2 = arith.constant 2 : index
    %c0_18 = arith.constant 0 : index
    %c0_19 = arith.constant 0 : index
    %18 = vector.load %arg3[%c2, %c0_18, %c0_19] : memref<4x16x128xbf16, #tpu.memory_space<vmem>>, vector<1x16x128xbf16>
    %19 = vector.shape_cast %18 : vector<1x16x128xbf16> to vector<16x128xbf16>
    %cst_20 = arith.constant dense<0.000000e+00> : vector<64x128xf32>
    %20 = tpu.matmul %17, %19, %cst_20 {dimension_numbers = #tpu.dot_dimension_numbers<[1], [0], [0], [1], [0, 0, 1, 1], [], []>} : vector<64x16xbf16>, vector<16x128xbf16>, vector<64x128xf32> -> vector<64x128xf32>
    %21 = arith.addf %14, %20 : vector<64x128xf32>
    %c0_21 = arith.constant 0 : index
    %c1_22 = arith.constant 1 : index
    %c1_23 = arith.constant 1 : index
    %c0_24 = arith.constant 0 : index
    %22 = vector.load %arg2[%c0_21, %c1_22, %c1_23, %c0_24] : memref<1x9x9x16xbf16, #tpu.memory_space<vmem>>, vector<1x8x8x16xbf16>
    %23 = vector.shape_cast %22 : vector<1x8x8x16xbf16> to vector<8x8x16xbf16>
    %24 = vector.shape_cast %23 : vector<8x8x16xbf16> to vector<64x16xbf16>
    %c3 = arith.constant 3 : index
    %c0_25 = arith.constant 0 : index
    %c0_26 = arith.constant 0 : index
    %25 = vector.load %arg3[%c3, %c0_25, %c0_26] : memref<4x16x128xbf16, #tpu.memory_space<vmem>>, vector<1x16x128xbf16>
    %26 = vector.shape_cast %25 : vector<1x16x128xbf16> to vector<16x128xbf16>
    %cst_27 = arith.constant dense<0.000000e+00> : vector<64x128xf32>
    %27 = tpu.matmul %24, %26, %cst_27 {dimension_numbers = #tpu.dot_dimension_numbers<[1], [0], [0], [1], [0, 0, 1, 1], [], []>} : vector<64x16xbf16>, vector<16x128xbf16>, vector<64x128xf32> -> vector<64x128xf32>
    %28 = arith.addf %21, %27 : vector<64x128xf32>
    %cst_28 = arith.constant dense<0.000000e+00> : vector<128xf32>
    %29 = vector.multi_reduction <add>, %28, %cst_28 [0] : vector<64x128xf32> to vector<128xf32>
    %30 = vector.shape_cast %29 : vector<128xf32> to vector<1x128xf32>
    %cst_29 = arith.constant 6.400000e+01 : f32
    %31 = vector.broadcast %cst_29 : f32 to vector<1x128xf32>
    %32 = arith.divf %30, %31 : vector<1x128xf32>
    %33 = arith.mulf %28, %28 : vector<64x128xf32>
    %cst_30 = arith.constant dense<0.000000e+00> : vector<128xf32>
    %34 = vector.multi_reduction <add>, %33, %cst_30 [0] : vector<64x128xf32> to vector<128xf32>
    %35 = vector.shape_cast %34 : vector<128xf32> to vector<1x128xf32>
    %cst_31 = arith.constant 6.400000e+01 : f32
    %36 = vector.broadcast %cst_31 : f32 to vector<1x128xf32>
    %37 = arith.divf %35, %36 : vector<1x128xf32>
    %38 = arith.mulf %32, %32 : vector<1x128xf32>
    %39 = arith.subf %37, %38 : vector<1x128xf32>
    %cst_32 = arith.constant 0.000000e+00 : f32
    %40 = vector.broadcast %cst_32 : f32 to vector<1x128xf32>
    %41 = arith.maximumf %39, %40 : vector<1x128xf32>
    %42 = vector.broadcast %32 : vector<1x128xf32> to vector<64x128xf32>
    %43 = arith.subf %28, %42 : vector<64x128xf32>
    %cst_33 = arith.constant 9.99999974E-6 : f32
    %44 = vector.broadcast %cst_33 : f32 to vector<1x128xf32>
    %45 = arith.addf %41, %44 : vector<1x128xf32>
    %46 = math.rsqrt %45 : vector<1x128xf32>
    %47 = vector.broadcast %46 : vector<1x128xf32> to vector<64x128xf32>
    %48 = arith.mulf %43, %47 : vector<64x128xf32>
    %cst_34 = arith.constant 0.000000e+00 : f32
    %49 = vector.broadcast %cst_34 : f32 to vector<64x128xf32>
    %50 = arith.cmpf oge, %48, %49 : vector<64x128xf32>
    %cst_35 = arith.constant 2.000000e-01 : f32
    %51 = vector.broadcast %cst_35 : f32 to vector<64x128xf32>
    %52 = arith.mulf %51, %48 : vector<64x128xf32>
    %53 = arith.select %50, %48, %52 : vector<64x128xi1>, vector<64x128xf32>
    %54 = vector.shape_cast %53 : vector<64x128xf32> to vector<1x8x8x128xf32>
    %c0_36 = arith.constant 0 : index
    %c0_37 = arith.constant 0 : index
    %c0_38 = arith.constant 0 : index
    %c0_39 = arith.constant 0 : index
    %55 = vector.load %arg4[%c0_36, %c0_37, %c0_38, %c0_39] : memref<1x8x8x128xf32, #tpu.memory_space<vmem>>, vector<1x8x8x128xf32>
    tpu.vector_store %arg4[%c0_36, %c0_37, %c0_38, %c0_39], %54 {strides = array<i32>} : memref<1x8x8x128xf32, #tpu.memory_space<vmem>>, vector<1x8x8x128xf32>,
    return
  }
  func.func @transform_0(%arg0: i32, %arg1: i32) -> (i32, i32, i32, i32) {
    %c0_i32 = arith.constant 0 : i32
    %c0_i32_0 = arith.constant 0 : i32
    %c0_i32_1 = arith.constant 0 : i32
    %c0_i32_2 = arith.constant 0 : i32
    return %arg1, %c0_i32, %c0_i32_0, %c0_i32_1 : i32, i32, i32, i32
  }
  func.func @transform_1(%arg0: i32, %arg1: i32) -> (i32, i32, i32) {
    %c0_i32 = arith.constant 0 : i32
    %c0_i32_0 = arith.constant 0 : i32
    %c0_i32_1 = arith.constant 0 : i32
    return %c0_i32, %c0_i32_0, %arg0 : i32, i32, i32
  }
  func.func @transform_2(%arg0: i32, %arg1: i32) -> (i32, i32, i32, i32) {
    %c0_i32 = arith.constant 0 : i32
    %c0_i32_0 = arith.constant 0 : i32
    %c0_i32_1 = arith.constant 0 : i32
    return %arg1, %c0_i32, %c0_i32_0, %arg0 : i32, i32, i32, i32
  }
}

</mosaic_0001>

<llo_original>
// kernel: unet_down.1
$region0: #{unet_down.1}
  #allocation0 [shape = 'u32[]', space=smem, size = 0x4, offset = 0x4, fixed_abs, tag = 'smem constant byte address 0x4 - core index']
  #allocation1 [shape = 'u32[144,128]{1,0:T(1,128)}', space=vmem, size = 0x12000, scoped, tag = 'internal scratch']
  %s0 = inlined_call_operand.vmem [shape: bf16[2,9,9,16], index: 0, kind: input, shape index: {}]
  %s1 = inlined_call_operand.vmem [shape: bf16[4,16,128], index: 1, kind: input, shape index: {}]
  %s2 = inlined_call_operand.vmem [shape: f32[2,8,8,128], index: 2, kind: output, shape index: {}]
  %s3 = sld [smem:[#allocation0]]
  $region41: #{unet_down.1} parent=0
    _
  %s5 = ssub.s32 1, %s3
  %s6 = scalar_select 0, %s5, %s3
  loop: start=0, step=1, limit=4
  $region2: #{unet_down.1} parent=0 // loop_pre_header
    _
  $region3: #{unet_down.1} parent=0 // loop_header
    %s8 = sphi 0, %s12
    %p9 = scmp.ge.s32.totalorder %s8, 4
    %s15 = sphi 0, %s27
    %s16 = sphi 0, %s23
    %s17 = sphi 0, %s15
    %s18 = sphi 0, %s16
    %s19 = sphi 0, %s17
    %s20 = sphi 0, %s18
    %s30 = sphi 0, %s32
    %s33 = sphi 0, %s30
    %s34 = sphi 0, %s33
    %s50 = sphi 0, %s34
    %s56 = sphi 0, %s58
    %s59 = sphi 0, %s56
    %s60 = sphi 0, %s59
    %s76 = sphi 0, %s60
    %s84 = sphi 0, %s86
    %s87 = sphi 0, %s84
    %s88 = sphi 0, %s87
    %s104 = sphi 0, %s88
  $region4: #{unet_down.1} parent=0 // loop_header_branch
    %11 = sbr.rel (%p9) target = $region8
  $region5: #{unet_down.1} parent=0 // loop_body
    %s13 = ssub.s32 %s8, 1
    %s14 = ssub.s32 %s8, 2
    %s21 = sadd.s32 1, %s16
    %p22 = scmp.ge.s32.totalorder %s21, 2
    %s23 = scalar_select %p22, 0, %s21
    %s24 = sadd.s32 1, %s15
    %s25 = scalar_select %p22, %s24, %s15
    %p26 = scmp.ge.s32.totalorder %s25, 1
    %s27 = scalar_select %p26, 0, %s25
    %s28 = ssub.s32 %s16, %s23
    %p29 = scmp.eq.s32.totalorder %s28, 0
    %s31 = sadd.s32 %s30, 1
    %s32 = scalar_select %p29, %s30, %s31
    %p35 = pneg %p29
    %p36 = scmp.eq.s32.totalorder %s8, 1
    %p37 = por %p35, %p36
    %p38 = scmp.ne.s32.totalorder %s30, %s33
    %p39 = scmp.eq.s32.totalorder %s8, 0
    %p40 = por %p38, %p39
    %p41 = scmp.ne.s32.totalorder %s30, %s33
    %p42 = scmp.eq.s32.totalorder %s13, 1
    %p43 = por %p41, %p42
    %p44 = scmp.ne.s32.totalorder %s33, %s34
    %p45 = scmp.eq.s32.totalorder %s13, 0
    %p46 = por %p44, %p45
    %p47 = scmp.ne.s32.totalorder %s33, %s34
    %p48 = scmp.eq.s32.totalorder %s14, 1
    %p49 = por %p47, %p48
    %p51 = scmp.ne.s32.totalorder %s34, %s50
    %p52 = scmp.eq.s32.totalorder %s14, 0
    %p53 = por %p51, %p52
    %s54 = ssub.s32 %s15, %s27
    %p55 = scmp.eq.s32.totalorder %s54, 0
    %s57 = sadd.s32 %s56, 1
    %s58 = scalar_select %p55, %s56, %s57
    %p61 = pneg %p55
    %p62 = scmp.eq.s32.totalorder %s8, 1
    %p63 = por %p61, %p62
    %p64 = scmp.ne.s32.totalorder %s56, %s59
    %p65 = scmp.eq.s32.totalorder %s8, 0
    %p66 = por %p64, %p65
    %p67 = scmp.ne.s32.totalorder %s56, %s59
    %p68 = scmp.eq.s32.totalorder %s13, 1
    %p69 = por %p67, %p68
    %p70 = scmp.ne.s32.totalorder %s59, %s60
    %p71 = scmp.eq.s32.totalorder %s13, 0
    %p72 = por %p70, %p71
    %p73 = scmp.ne.s32.totalorder %s59, %s60
    %p74 = scmp.eq.s32.totalorder %s14, 1
    %p75 = por %p73, %p74
    %p77 = scmp.ne.s32.totalorder %s60, %s76
    %p78 = scmp.eq.s32.totalorder %s14, 0
    %p79 = por %p77, %p78
    %s80 = ssub.s32 %s16, %s23
    %s81 = ssub.s32 %s15, %s27
    %s82 = sor.u32 %s80, %s81
    %p83 = scmp.eq.s32.totalorder %s82, 0
    %s85 = sadd.s32 %s84, 1
    %s86 = scalar_select %p83, %s84, %s85
    %p89 = pneg %p83
    %p90 = scmp.eq.s32.totalorder %s8, 1
    %p91 = por %p89, %p90
    %p92 = scmp.ne.s32.totalorder %s84, %s87
    %p93 = scmp.eq.s32.totalorder %s8, 0
    %p94 = por %p92, %p93
    %p95 = scmp.ne.s32.totalorder %s84, %s87
    %p96 = scmp.eq.s32.totalorder %s13, 1
    %p97 = por %p95, %p96
    %p98 = scmp.ne.s32.totalorder %s87, %s88
    %p99 = scmp.eq.s32.totalorder %s13, 0
    %p100 = por %p98, %p99
    %p101 = scmp.ne.s32.totalorder %s87, %s88
    %p102 = scmp.eq.s32.totalorder %s14, 1
    %p103 = por %p101, %p102
    %p105 = scmp.ne.s32.totalorder %s88, %s104
    %p106 = scmp.eq.s32.totalorder %s14, 0
    %p107 = por %p105, %p106
    %p108 = scmp.le.s32.totalorder 1, %s8
    %p109 = scmp.lt.s32.totalorder %s8, 3
    %p110 = pnand %p108, %p109
    %p111 = pneg %p110
    // Predicated region
    $region9: #{unet_down.1} parent=5 // pred_check
      _
    $region10: #{unet_down.1} parent=5 // pred_check_branch
      %113 = sbr.rel (%p110) target = $region12
    $region11: #{unet_down.1} parent=5 // pred_region
      %s114 = ssub.s32 %s8, 1
      // Predicated region
      $region13: #{unet_down.1} parent=11 // pred_check
        %p115 = pneg %p72
      $region14: #{unet_down.1} parent=11 // pred_check_branch
        %117 = sbr.rel (%p115) target = $region16
      $region15: #{unet_down.1} parent=11 // pred_region
        %p118 = scmp.lt.s32.totalorder %s17, 0
        %s119 = scalar_select %p118, %s17, 0
        %s120 = smul.addr %s119, 4
        %s121 = scalar_lea.vmem %s1, %s120
      $region16: #{unet_down.1} parent=11 // pred_fallthru
        _
    $region12: #{unet_down.1} parent=5 // pred_fallthru
      _
    %p122 = scmp.lt.s32.totalorder %s8, 2
    // Predicated region
    $region17: #{unet_down.1} parent=5 // pred_check
      %p123 = pneg %p122
    $region18: #{unet_down.1} parent=5 // pred_check_branch
      %125 = sbr.rel (%p123) target = $region20
    $region19: #{unet_down.1} parent=5 // pred_region
      // Predicated region
      $region21: #{unet_down.1} parent=19 // pred_check
        %p126 = pneg %p40
      $region22: #{unet_down.1} parent=19 // pred_check_branch
        %128 = sbr.rel (%p126) target = $region24
      $region23: #{unet_down.1} parent=19 // pred_region
        %p129 = scmp.lt.s32.totalorder %s16, 1
        %s130 = scalar_select %p129, %s16, 1
        %s131 = smul.addr %s130, 18
        %s132 = smul.addr %s131, 4
        %s133 = scalar_lea.vmem %s0, %s132
      $region24: #{unet_down.1} parent=19 // pred_fallthru
        _
    $region20: #{unet_down.1} parent=5 // pred_fallthru
      _
    %p134 = scmp.le.s32.totalorder 1, %s8
    %p135 = scmp.lt.s32.totalorder %s8, 3
    %p136 = pnand %p134, %p135
    %p137 = pneg %p136
    // Predicated region
    $region25: #{unet_down.1} parent=5 // pred_check
      _
    $region26: #{unet_down.1} parent=5 // pred_check_branch
      %139 = sbr.rel (%p136) target = $region28
    $region27: #{unet_down.1} parent=5 // pred_region
      %s140 = ssub.s32 %s8, 1
      %p141 = scmp.lt.s32.totalorder %s18, 1
      %s142 = scalar_select %p141, %s18, 1
      %s143 = smul.addr %s142, 18
      %s144 = smul.addr %s143, 4
      %s145 = scalar_lea.vmem %s0, %s144
      %p146 = pneg %p46
      %p147 = pneg %p43
      %p148 = scmp.lt.s32.totalorder %s17, 0
      %s149 = scalar_select %p148, %s17, 0
      %s150 = smul.addr %s149, 4
      %s151 = scalar_lea.vmem %s1, %s150
      %p152 = pneg %p72
      %p153 = pneg %p69
      %p154 = pneg %p100
      %p155 = pneg %p97
      %p156 = scmp.lt.s32.totalorder %s18, 1
      %s157 = scalar_select %p156, %s18, 1
      %p158 = scmp.lt.s32.totalorder %s17, 0
      %s159 = scalar_select %p158, %s17, 0
      %s160 = smul.addr %s157, 8
      %s161 = sadd.s32 %s159, %s160
      %s162 = smul.addr %s161, 8
      %s163 = scalar_lea.vmem %s2, %s162
      %p164 = scmp.lt.s32.totalorder %s18, 1
      %s165 = scalar_select %p164, %s18, 1
      %s166 = smul.addr %s165, 18
      %s167 = smul.addr %s166, 4
      %s168 = scalar_lea.vmem %s0, %s167
      %p169 = scmp.lt.s32.totalorder %s17, 0
      %s170 = scalar_select %p169, %s17, 0
      %s171 = smul.addr %s170, 4
      %s172 = scalar_lea.vmem %s1, %s171
      %p173 = scmp.lt.s32.totalorder %s18, 1
      %s174 = scalar_select %p173, %s18, 1
      %p175 = scmp.lt.s32.totalorder %s17, 0
      %s176 = scalar_select %p175, %s17, 0
      %s177 = smul.addr %s174, 8
      %s178 = sadd.s32 %s176, %s177
      %s179 = smul.addr %s178, 8
      %s180 = scalar_lea.vmem %s2, %s179
      %v182 = vld [vmem:[%s168] sm:$0xf]
      %v183 = vld [vmem:[%s168 + $0x8] sm:$0xf]
      %v184 = vld [vmem:[%s168 + $0x10] sm:$0xf]
      %v185 = vld [vmem:[%s168 + $0x18] sm:$0xf]
      %v186 = vld [vmem:[%s168 + $0x20] sm:$0xf]
      %v187 = vld [vmem:[%s168 + $0x28] sm:$0xf]
      %v188 = vld [vmem:[%s168 + $0x30] sm:$0xf]
      %v189 = vld [vmem:[%s168 + $0x38] sm:$0xf]
      %v190 = vld [vmem:[%s172] sm:$0xf]
      %v191 = vld [vmem:[%s172 + $0x4] sm:$0xf]
      %v192 = vld [vmem:[%s168 + $0x4] sm:$0x1]
      %v193 = vld [vmem:[%s168 + $0xc] sm:$0x1]
      %v194 = vld [vmem:[%s168 + $0x14] sm:$0x1]
      %v195 = vld [vmem:[%s168 + $0x1c] sm:$0x1]
      %v196 = vld [vmem:[%s168 + $0x24] sm:$0x1]
      %v197 = vld [vmem:[%s168 + $0x2c] sm:$0x1]
      %v198 = vld [vmem:[%s168 + $0x34] sm:$0x1]
      %v199 = vld [vmem:[%s168 + $0x3c] sm:$0x1]
      %vm200 = vsmask.f32 3328
      %vm201 = vsmask.f32 7440
      %vm202 = vmor %vm200, %vm201
      %v204 = vshrl.u32 %v182, 16
      %v206 = vrot.slane %v204, 4
      %v207 = vshll.u32 %v182, 16
      %v209 = vrot.slane %v207, 5
      %v210 = vor.u32 %v206, %v209
      %v211 = vrot.slane %v210, 4
      %v213 = vshll.u32 %v192, 16
      %v215 = vrot.slane %v213, 5
      %v216 = vsel %vm202, %v211, %v215
      %v218 = vshrl.u32 %v183, 16
      %v220 = vrot.slane %v218, 4
      %v221 = vshll.u32 %v183, 16
      %v223 = vrot.slane %v221, 5
      %v224 = vor.u32 %v220, %v223
      %v225 = vrot.slane %v224, 4
      %v227 = vshll.u32 %v193, 16
      %v229 = vrot.slane %v227, 5
      %v230 = vsel %vm202, %v225, %v229
      %v232 = vshrl.u32 %v184, 16
      %v234 = vrot.slane %v232, 4
      %v235 = vshll.u32 %v184, 16
      %v237 = vrot.slane %v235, 5
      %v238 = vor.u32 %v234, %v237
      %v239 = vrot.slane %v238, 4
      %v241 = vshll.u32 %v194, 16
      %v243 = vrot.slane %v241, 5
      %v244 = vsel %vm202, %v239, %v243
      %v246 = vshrl.u32 %v185, 16
      %v248 = vrot.slane %v246, 4
      %v249 = vshll.u32 %v185, 16
      %v251 = vrot.slane %v249, 5
      %v252 = vor.u32 %v248, %v251
      %v253 = vrot.slane %v252, 4
      %v255 = vshll.u32 %v195, 16
      %v257 = vrot.slane %v255, 5
      %v258 = vsel %vm202, %v253, %v257
      %v260 = vshrl.u32 %v186, 16
      %v262 = vrot.slane %v260, 4
      %v263 = vshll.u32 %v186, 16
      %v265 = vrot.slane %v263, 5
      %v266 = vor.u32 %v262, %v265
      %v267 = vrot.slane %v266, 4
      %v269 = vshll.u32 %v196, 16
      %v271 = vrot.slane %v269, 5
      %v272 = vsel %vm202, %v267, %v271
      %v274 = vshrl.u32 %v187, 16
      %v276 = vrot.slane %v274, 4
      %v277 = vshll.u32 %v187, 16
      %v279 = vrot.slane %v277, 5
      %v280 = vor.u32 %v276, %v279
      %v281 = vrot.slane %v280, 4
      %v283 = vshll.u32 %v197, 16
      %v285 = vrot.slane %v283, 5
      %v286 = vsel %vm202, %v281, %v285
      %v288 = vshrl.u32 %v188, 16
      %v290 = vrot.slane %v288, 4
      %v291 = vshll.u32 %v188, 16
      %v293 = vrot.slane %v291, 5
      %v294 = vor.u32 %v290, %v293
      %v295 = vrot.slane %v294, 4
      %v297 = vshll.u32 %v198, 16
      %v299 = vrot.slane %v297, 5
      %v300 = vsel %vm202, %v295, %v299
      %v302 = vshrl.u32 %v189, 16
      %v304 = vrot.slane %v302, 4
      %v305 = vshll.u32 %v189, 16
      %v307 = vrot.slane %v305, 5
      %v308 = vor.u32 %v304, %v307
      %v309 = vrot.slane %v308, 4
      %v311 = vshll.u32 %v199, 16
      %v313 = vrot.slane %v311, 5
      %v314 = vsel %vm202, %v309, %v313
      %s315 = scalar_lea.vmem %s172, 8
      %v316 = vld [vmem:[%s315] sm:$0xf]
      %v317 = vld [vmem:[%s315 + $0x4] sm:$0xf]
      %v318 = vunpack.c.l.b16 %v216
      %v319 = vunpack.c.l.b16 %v230
      %v320 = vunpack.c.l.b16 %v244
      %v321 = vunpack.c.l.b16 %v258
      %v322 = vunpack.c.l.b16 %v272
      %v323 = vunpack.c.l.b16 %v286
      %v324 = vunpack.c.l.b16 %v300
      %v325 = vunpack.c.l.b16 %v314
      %v326 = vpack.c.b16 %v319, %v318
      %v327 = vpack.c.b16 %v321, %v320
      %v328 = vpack.c.b16 %v323, %v322
      %v329 = vpack.c.b16 %v325, %v324
      %v332 = vunpack.c.l.b16 %v316
      %v333 = vunpack.c.l.b16 %v317
      %v334 = vpack.c.b16 %v333, %v332
      %vm336 = vcmask 130048
      %v338 = vsel %vm336, %v326, 0
      %v341 = vsel %vm336, %v327, 0
      %v344 = vsel %vm336, %v328, 0
      %v347 = vsel %vm336, %v329, 0
      %349 = vmatprep.subr.bf16.mxu0 0
      %350 = vmatpush1.bf16.msra.mxu0 %v334
      %351 = vmatprep.subr.bf16.mxu0 0
      %352 = vmatpush1.bf16.msra.mxu0 0
      %353 = vmatprep.subr.bf16.mxu0 0
      %354 = vmatpush1.bf16.msra.mxu0 0
      %355 = vmatprep.subr.bf16.mxu0 0
      %356 = vmatpush1.bf16.msra.mxu0 0
      %357 = vmatprep.subr.bf16.mxu0 0
      %358 = vmatpush1.bf16.msra.mxu0 0
      %359 = vmatprep.subr.bf16.mxu0 0
      %360 = vmatpush1.bf16.msra.mxu0 0
      %361 = vmatprep.subr.bf16.mxu0 0
      %362 = vmatpush1.bf16.msra.mxu0 0
      %363 = vmatprep.subr.bf16.mxu0 0
      %364 = vmatpush1.bf16.msra.mxu0 0
      %365 = vmatprep.subr.bf16.mxu0 0
      %366 = vmatpush1.bf16.msra.mxu0 0
      %367 = vmatprep.subr.bf16.mxu0 0
      %368 = vmatpush1.bf16.msra.mxu0 0
      %369 = vmatprep.subr.bf16.mxu0 0
      %370 = vmatpush1.bf16.msra.mxu0 0
      %371 = vmatprep.subr.bf16.mxu0 0
      %372 = vmatpush1.bf16.msra.mxu0 0
      %373 = vmatprep.subr.bf16.mxu0 0
      %374 = vmatpush1.bf16.msra.mxu0 0
      %375 = vmatprep.subr.bf16.mxu0 0
      %376 = vmatpush1.bf16.msra.mxu0 0
      %377 = vmatprep.subr.bf16.mxu0 0
      %378 = vmatpush1.bf16.msra.mxu0 0
      %379 = vmatprep.subr.bf16.mxu0 0
      %380 = vmatpush1.bf16.msra.mxu0 0
      %381 = vmatprep.mubr.bf16.mxu0 0
      %382 = vmatmul.mubr.bf16.gmra.mrb[0].mxu0 %v338
      %v383 = vpop.f32.mrb[0].mxu0
      %v384 = vadd.f32 0.0, %v383
      %v385 = vpop.f32.mrb[0].mxu0
      %v386 = vpop.f32.mrb[0].mxu0
      %v387 = vadd.f32 0.0, %v386
      %v388 = vpop.f32.mrb[0].mxu0
      %389 = vmatprep.mubr.bf16.mxu0 0
      %390 = vmatmul.mubr.bf16.gmra.mrb[0].mxu0 %v341
      %v391 = vpop.f32.mrb[0].mxu0
      %v392 = vadd.f32 0.0, %v391
      %v393 = vpop.f32.mrb[0].mxu0
      %v394 = vpop.f32.mrb[0].mxu0
      %v395 = vadd.f32 0.0, %v394
      %v396 = vpop.f32.mrb[0].mxu0
      %397 = vmatprep.mubr.bf16.mxu0 0
      %398 = vmatmul.mubr.bf16.gmra.mrb[0].mxu0 %v344
      %v399 = vpop.f32.mrb[0].mxu0
      %v400 = vadd.f32 0.0, %v399
      %v401 = vpop.f32.mrb[0].mxu0
      %v402 = vpop.f32.mrb[0].mxu0
      %v403 = vadd.f32 0.0, %v402
      %v404 = vpop.f32.mrb[0].mxu0
      %405 = vmatprep.mubr.bf16.mxu0 0
      %406 = vmatmul.mubr.bf16.gmra.mrb[0].mxu0 %v347
      %v407 = vpop.f32.mrb[0].mxu0
      %v408 = vadd.f32 0.0, %v407
      %v409 = vpop.f32.mrb[0].mxu0
      %v410 = vpop.f32.mrb[0].mxu0
      %v411 = vadd.f32 0.0, %v410
      %v412 = vpop.f32.mrb[0].mxu0
      %413 = vdwg.mxu0
      %v422 = vunpack.c.l.b16 %v182
      %v423 = vunpack.c.l.b16 %v183
      %v424 = vunpack.c.l.b16 %v184
      %v425 = vunpack.c.l.b16 %v185
      %v426 = vunpack.c.l.b16 %v186
      %v427 = vunpack.c.l.b16 %v187
      %v428 = vunpack.c.l.b16 %v188
      %v429 = vunpack.c.l.b16 %v189
      %v430 = vpack.c.b16 %v423, %v422
      %v431 = vpack.c.b16 %v425, %v424
      %v432 = vpack.c.b16 %v427, %v426
      %v433 = vpack.c.b16 %v429, %v428
      %v436 = vunpack.c.l.b16 %v190
      %v437 = vunpack.c.l.b16 %v191
      %v438 = vpack.c.b16 %v437, %v436
      %v441 = vsel %vm336, %v430, 0
      %v444 = vsel %vm336, %v431, 0
      %v447 = vsel %vm336, %v432, 0
      %v450 = vsel %vm336, %v433, 0
      %452 = vmatprep.subr.bf16.mxu0 0
      %453 = vmatpush1.bf16.msra.mxu0 %v438
      %454 = vmatprep.subr.bf16.mxu0 0
      %455 = vmatpush1.bf16.msra.mxu0 0
      %456 = vmatprep.subr.bf16.mxu0 0
      %457 = vmatpush1.bf16.msra.mxu0 0
      %458 = vmatprep.subr.bf16.mxu0 0
      %459 = vmatpush1.bf16.msra.mxu0 0
      %460 = vmatprep.subr.bf16.mxu0 0
      %461 = vmatpush1.bf16.msra.mxu0 0
      %462 = vmatprep.subr.bf16.mxu0 0
      %463 = vmatpush1.bf16.msra.mxu0 0
      %464 = vmatprep.subr.bf16.mxu0 0
      %465 = vmatpush1.bf16.msra.mxu0 0
      %466 = vmatprep.subr.bf16.mxu0 0
      %467 = vmatpush1.bf16.msra.mxu0 0
      %468 = vmatprep.subr.bf16.mxu0 0
      %469 = vmatpush1.bf16.msra.mxu0 0
      %470 = vmatprep.subr.bf16.mxu0 0
      %471 = vmatpush1.bf16.msra.mxu0 0
      %472 = vmatprep.subr.bf16.mxu0 0
      %473 = vmatpush1.bf16.msra.mxu0 0
      %474 = vmatprep.subr.bf16.mxu0 0
      %475 = vmatpush1.bf16.msra.mxu0 0
      %476 = vmatprep.subr.bf16.mxu0 0
      %477 = vmatpush1.bf16.msra.mxu0 0
      %478 = vmatprep.subr.bf16.mxu0 0
      %479 = vmatpush1.bf16.msra.mxu0 0
      %480 = vmatprep.subr.bf16.mxu0 0
      %481 = vmatpush1.bf16.msra.mxu0 0
      %482 = vmatprep.subr.bf16.mxu0 0
      %483 = vmatpush1.bf16.msra.mxu0 0
      %484 = vmatprep.mubr.bf16.mxu0 0
      %485 = vmatmul.mubr.bf16.gmra.mrb[0].mxu0 %v441
      %v486 = vpop.f32.mrb[0].mxu0
      %v487 = vadd.f32 %v384, %v486
      %v488 = vpop.f32.mrb[0].mxu0
      %v489 = vpop.f32.mrb[0].mxu0
      %v490 = vadd.f32 %v387, %v489
      %v491 = vpop.f32.mrb[0].mxu0
      %492 = vmatprep.mubr.bf16.mxu0 0
      %493 = vmatmul.mubr.bf16.gmra.mrb[0].mxu0 %v444
      %v494 = vpop.f32.mrb[0].mxu0
      %v495 = vadd.f32 %v392, %v494
      %v496 = vpop.f32.mrb[0].mxu0
      %v497 = vpop.f32.mrb[0].mxu0
      %v498 = vadd.f32 %v395, %v497
      %v499 = vpop.f32.mrb[0].mxu0
      %500 = vmatprep.mubr.bf16.mxu0 0
      %501 = vmatmul.mubr.bf16.gmra.mrb[0].mxu0 %v447
      %v502 = vpop.f32.mrb[0].mxu0
      %v503 = vadd.f32 %v400, %v502
      %v504 = vpop.f32.mrb[0].mxu0
      %v505 = vpop.f32.mrb[0].mxu0
      %v506 = vadd.f32 %v403, %v505
      %v507 = vpop.f32.mrb[0].mxu0
      %508 = vmatprep.mubr.bf16.mxu0 0
      %509 = vmatmul.mubr.bf16.gmra.mrb[0].mxu0 %v450
      %v510 = vpop.f32.mrb[0].mxu0
      %v511 = vadd.f32 %v408, %v510
      %v512 = vpop.f32.mrb[0].mxu0
      %v513 = vpop.f32.mrb[0].mxu0
      %v514 = vadd.f32 %v411, %v513
      %v515 = vpop.f32.mrb[0].mxu0
      %516 = vdwg.mxu0
      %s517 = scalar_lea.vmem %s168, 8
      %v518 = vld [vmem:[%s517] sm:$0xf]
      %v519 = vld [vmem:[%s517 + $0x8] sm:$0xf]
      %v520 = vld [vmem:[%s517 + $0x10] sm:$0xf]
      %v521 = vld [vmem:[%s517 + $0x18] sm:$0xf]
      %v522 = vld [vmem:[%s517 + $0x20] sm:$0xf]
      %v523 = vld [vmem:[%s517 + $0x28] sm:$0xf]
      %v524 = vld [vmem:[%s517 + $0x30] sm:$0xf]
      %v525 = vld [vmem:[%s517 + $0x38] sm:$0xf]
      %s526 = scalar_lea.vmem %s172, 16
      %v527 = vld [vmem:[%s526] sm:$0xf]
      %v528 = vld [vmem:[%s526 + $0x4] sm:$0xf]
      %v537 = vunpack.c.l.b16 %v518
      %v538 = vunpack.c.l.b16 %v519
      %v539 = vunpack.c.l.b16 %v520
      %v540 = vunpack.c.l.b16 %v521
      %v541 = vunpack.c.l.b16 %v522
      %v542 = vunpack.c.l.b16 %v523
      %v543 = vunpack.c.l.b16 %v524
      %v544 = vunpack.c.l.b16 %v525
      %v545 = vpack.c.b16 %v538, %v537
      %v546 = vpack.c.b16 %v540, %v539
      %v547 = vpack.c.b16 %v542, %v541
      %v548 = vpack.c.b16 %v544, %v543
      %v551 = vunpack.c.l.b16 %v527
      %v552 = vunpack.c.l.b16 %v528
      %v553 = vpack.c.b16 %v552, %v551
      %v556 = vsel %vm336, %v545, 0
      %v559 = vsel %vm336, %v546, 0
      %v562 = vsel %vm336, %v547, 0
      %v565 = vsel %vm336, %v548, 0
      %567 = vmatprep.subr.bf16.mxu0 0
      %568 = vmatpush1.bf16.msra.mxu0 %v553
      %569 = vmatprep.subr.bf16.mxu0 0
      %570 = vmatpush1.bf16.msra.mxu0 0
      %571 = vmatprep.subr.bf16.mxu0 0
      %572 = vmatpush1.bf16.msra.mxu0 0
      %573 = vmatprep.subr.bf16.mxu0 0
      %574 = vmatpush1.bf16.msra.mxu0 0
      %575 = vmatprep.subr.bf16.mxu0 0
      %576 = vmatpush1.bf16.msra.mxu0 0
      %577 = vmatprep.subr.bf16.mxu0 0
      %578 = vmatpush1.bf16.msra.mxu0 0
      %579 = vmatprep.subr.bf16.mxu0 0
      %580 = vmatpush1.bf16.msra.mxu0 0
      %581 = vmatprep.subr.bf16.mxu0 0
      %582 = vmatpush1.bf16.msra.mxu0 0
      %583 = vmatprep.subr.bf16.mxu0 0
      %584 = vmatpush1.bf16.msra.mxu0 0
      %585 = vmatprep.subr.bf16.mxu0 0
      %586 = vmatpush1.bf16.msra.mxu0 0
      %587 = vmatprep.subr.bf16.mxu0 0
      %588 = vmatpush1.bf16.msra.mxu0 0
      %589 = vmatprep.subr.bf16.mxu0 0
      %590 = vmatpush1.bf16.msra.mxu0 0
      %591 = vmatprep.subr.bf16.mxu0 0
      %592 = vmatpush1.bf16.msra.mxu0 0
      %593 = vmatprep.subr.bf16.mxu0 0
      %594 = vmatpush1.bf16.msra.mxu0 0
      %595 = vmatprep.subr.bf16.mxu0 0
      %596 = vmatpush1.bf16.msra.mxu0 0
      %597 = vmatprep.subr.bf16.mxu0 0
      %598 = vmatpush1.bf16.msra.mxu0 0
      %599 = vmatprep.mubr.bf16.mxu0 0
      %600 = vmatmul.mubr.bf16.gmra.mrb[0].mxu0 %v556
      %v601 = vpop.f32.mrb[0].mxu0
      %v602 = vadd.f32 0.0, %v601
      %v603 = vpop.f32.mrb[0].mxu0
      %v604 = vpop.f32.mrb[0].mxu0
      %v605 = vadd.f32 0.0, %v604
      %v606 = vpop.f32.mrb[0].mxu0
      %607 = vmatprep.mubr.bf16.mxu0 0
      %608 = vmatmul.mubr.bf16.gmra.mrb[0].mxu0 %v559
      %v609 = vpop.f32.mrb[0].mxu0
      %v610 = vadd.f32 0.0, %v609
      %v611 = vpop.f32.mrb[0].mxu0
      %v612 = vpop.f32.mrb[0].mxu0
      %v613 = vadd.f32 0.0, %v612
      %v614 = vpop.f32.mrb[0].mxu0
      %615 = vmatprep.mubr.bf16.mxu0 0
      %616 = vmatmul.mubr.bf16.gmra.mrb[0].mxu0 %v562
      %v617 = vpop.f32.mrb[0].mxu0
      %v618 = vadd.f32 0.0, %v617
      %v619 = vpop.f32.mrb[0].mxu0
      %v620 = vpop.f32.mrb[0].mxu0
      %v621 = vadd.f32 0.0, %v620
      %v622 = vpop.f32.mrb[0].mxu0
      %623 = vmatprep.mubr.bf16.mxu0 0
      %624 = vmatmul.mubr.bf16.gmra.mrb[0].mxu0 %v565
      %v625 = vpop.f32.mrb[0].mxu0
      %v626 = vadd.f32 0.0, %v625
      %v627 = vpop.f32.mrb[0].mxu0
      %v628 = vpop.f32.mrb[0].mxu0
      %v629 = vadd.f32 0.0, %v628
      %v630 = vpop.f32.mrb[0].mxu0
      %631 = vdwg.mxu0
      %v632 = vadd.f32 %v487, %v602
      %v633 = vadd.f32 %v490, %v605
      %v634 = vadd.f32 %v495, %v610
      %v635 = vadd.f32 %v498, %v613
      %v636 = vadd.f32 %v503, %v618
      %v637 = vadd.f32 %v506, %v621
      %v638 = vadd.f32 %v511, %v626
      %v639 = vadd.f32 %v514, %v629
      %v640 = vld [vmem:[%s517] sm:$0xf]
      %v641 = vld [vmem:[%s517 + $0x4] sm:$0x1]
      %v642 = vld [vmem:[%s517 + $0x8] sm:$0xf]
      %v643 = vld [vmem:[%s517 + $0xc] sm:$0x1]
      %v644 = vld [vmem:[%s517 + $0x10] sm:$0xf]
      %v645 = vld [vmem:[%s517 + $0x14] sm:$0x1]
      %v646 = vld [vmem:[%s517 + $0x18] sm:$0xf]
      %v647 = vld [vmem:[%s517 + $0x1c] sm:$0x1]
      %v648 = vld [vmem:[%s517 + $0x20] sm:$0xf]
      %v649 = vld [vmem:[%s517 + $0x24] sm:$0x1]
      %v650 = vld [vmem:[%s517 + $0x28] sm:$0xf]
      %v651 = vld [vmem:[%s517 + $0x2c] sm:$0x1]
      %v652 = vld [vmem:[%s517 + $0x30] sm:$0xf]
      %v653 = vld [vmem:[%s517 + $0x34] sm:$0x1]
      %v654 = vld [vmem:[%s517 + $0x38] sm:$0xf]
      %v655 = vld [vmem:[%s517 + $0x3c] sm:$0x1]
      %v657 = vshrl.u32 %v640, 16
      %v659 = vrot.slane %v657, 4
      %v660 = vshll.u32 %v640, 16
      %v662 = vrot.slane %v660, 5
      %v663 = vor.u32 %v659, %v662
      %v664 = vrot.slane %v663, 4
      %v666 = vshll.u32 %v641, 16
      %v668 = vrot.slane %v666, 5
      %v669 = vsel %vm202, %v664, %v668
      %v671 = vshrl.u32 %v642, 16
      %v673 = vrot.slane %v671, 4
      %v674 = vshll.u32 %v642, 16
      %v676 = vrot.slane %v674, 5
      %v677 = vor.u32 %v673, %v676
      %v678 = vrot.slane %v677, 4
      %v680 = vshll.u32 %v643, 16
      %v682 = vrot.slane %v680, 5
      %v683 = vsel %vm202, %v678, %v682
      %v685 = vshrl.u32 %v644, 16
      %v687 = vrot.slane %v685, 4
      %v688 = vshll.u32 %v644, 16
      %v690 = vrot.slane %v688, 5
      %v691 = vor.u32 %v687, %v690
      %v692 = vrot.slane %v691, 4
      %v694 = vshll.u32 %v645, 16
      %v696 = vrot.slane %v694, 5
      %v697 = vsel %vm202, %v692, %v696
      %v699 = vshrl.u32 %v646, 16
      %v701 = vrot.slane %v699, 4
      %v702 = vshll.u32 %v646, 16
      %v704 = vrot.slane %v702, 5
      %v705 = vor.u32 %v701, %v704
      %v706 = vrot.slane %v705, 4
      %v708 = vshll.u32 %v647, 16
      %v710 = vrot.slane %v708, 5
      %v711 = vsel %vm202, %v706, %v710
      %v713 = vshrl.u32 %v648, 16
      %v715 = vrot.slane %v713, 4
      %v716 = vshll.u32 %v648, 16
      %v718 = vrot.slane %v716, 5
      %v719 = vor.u32 %v715, %v718
      %v720 = vrot.slane %v719, 4
      %v722 = vshll.u32 %v649, 16
      %v724 = vrot.slane %v722, 5
      %v725 = vsel %vm202, %v720, %v724
      %v727 = vshrl.u32 %v650, 16
      %v729 = vrot.slane %v727, 4
      %v730 = vshll.u32 %v650, 16
      %v732 = vrot.slane %v730, 5
      %v733 = vor.u32 %v729, %v732
      %v734 = vrot.slane %v733, 4
      %v736 = vshll.u32 %v651, 16
      %v738 = vrot.slane %v736, 5
      %v739 = vsel %vm202, %v734, %v738
      %v741 = vshrl.u32 %v652, 16
      %v743 = vrot.slane %v741, 4
      %v744 = vshll.u32 %v652, 16
      %v746 = vrot.slane %v744, 5
      %v747 = vor.u32 %v743, %v746
      %v748 = vrot.slane %v747, 4
      %v750 = vshll.u32 %v653, 16
      %v752 = vrot.slane %v750, 5
      %v753 = vsel %vm202, %v748, %v752
      %v755 = vshrl.u32 %v654, 16
      %v757 = vrot.slane %v755, 4
      %v758 = vshll.u32 %v654, 16
      %v760 = vrot.slane %v758, 5
      %v761 = vor.u32 %v757, %v760
      %v762 = vrot.slane %v761, 4
      %v764 = vshll.u32 %v655, 16
      %v766 = vrot.slane %v764, 5
      %v767 = vsel %vm202, %v762, %v766
      %s768 = scalar_lea.vmem %s172, 24
      %v769 = vld [vmem:[%s768] sm:$0xf]
      %v770 = vld [vmem:[%s768 + $0x4] sm:$0xf]
      %v771 = vunpack.c.l.b16 %v669
      %v772 = vunpack.c.l.b16 %v683
      %v773 = vunpack.c.l.b16 %v697
      %v774 = vunpack.c.l.b16 %v711
      %v775 = vunpack.c.l.b16 %v725
      %v776 = vunpack.c.l.b16 %v739
      %v777 = vunpack.c.l.b16 %v753
      %v778 = vunpack.c.l.b16 %v767
      %v779 = vpack.c.b16 %v772, %v771
      %v780 = vpack.c.b16 %v774, %v773
      %v781 = vpack.c.b16 %v776, %v775
      %v782 = vpack.c.b16 %v778, %v777
      %v785 = vunpack.c.l.b16 %v769
      %v786 = vunpack.c.l.b16 %v770
      %v787 = vpack.c.b16 %v786, %v785
      %v790 = vsel %vm336, %v779, 0
      %v793 = vsel %vm336, %v780, 0
      %v796 = vsel %vm336, %v781, 0
      %v799 = vsel %vm336, %v782, 0
      %801 = vmatprep.subr.bf16.mxu0 0
      %802 = vmatpush1.bf16.msra.mxu0 %v787
      %803 = vmatprep.subr.bf16.mxu0 0
      %804 = vmatpush1.bf16.msra.mxu0 0
      %805 = vmatprep.subr.bf16.mxu0 0
      %806 = vmatpush1.bf16.msra.mxu0 0
      %807 = vmatprep.subr.bf16.mxu0 0
      %808 = vmatpush1.bf16.msra.mxu0 0
      %809 = vmatprep.subr.bf16.mxu0 0
      %810 = vmatpush1.bf16.msra.mxu0 0
      %811 = vmatprep.subr.bf16.mxu0 0
      %812 = vmatpush1.bf16.msra.mxu0 0
      %813 = vmatprep.subr.bf16.mxu0 0
      %814 = vmatpush1.bf16.msra.mxu0 0
      %815 = vmatprep.subr.bf16.mxu0 0
      %816 = vmatpush1.bf16.msra.mxu0 0
      %817 = vmatprep.subr.bf16.mxu0 0
      %818 = vmatpush1.bf16.msra.mxu0 0
      %819 = vmatprep.subr.bf16.mxu0 0
      %820 = vmatpush1.bf16.msra.mxu0 0
      %821 = vmatprep.subr.bf16.mxu0 0
      %822 = vmatpush1.bf16.msra.mxu0 0
      %823 = vmatprep.subr.bf16.mxu0 0
      %824 = vmatpush1.bf16.msra.mxu0 0
      %825 = vmatprep.subr.bf16.mxu0 0
      %826 = vmatpush1.bf16.msra.mxu0 0
      %827 = vmatprep.subr.bf16.mxu0 0
      %828 = vmatpush1.bf16.msra.mxu0 0
      %829 = vmatprep.subr.bf16.mxu0 0
      %830 = vmatpush1.bf16.msra.mxu0 0
      %831 = vmatprep.subr.bf16.mxu0 0
      %832 = vmatpush1.bf16.msra.mxu0 0
      %833 = vmatprep.mubr.bf16.mxu0 0
      %834 = vmatmul.mubr.bf16.gmra.mrb[0].mxu0 %v790
      %v835 = vpop.f32.mrb[0].mxu0
      %v836 = vadd.f32 0.0, %v835
      %v837 = vpop.f32.mrb[0].mxu0
      %v838 = vpop.f32.mrb[0].mxu0
      %v839 = vadd.f32 0.0, %v838
      %v840 = vpop.f32.mrb[0].mxu0
      %841 = vmatprep.mubr.bf16.mxu0 0
      %842 = vmatmul.mubr.bf16.gmra.mrb[0].mxu0 %v793
      %v843 = vpop.f32.mrb[0].mxu0
      %v844 = vadd.f32 0.0, %v843
      %v845 = vpop.f32.mrb[0].mxu0
      %v846 = vpop.f32.mrb[0].mxu0
      %v847 = vadd.f32 0.0, %v846
      %v848 = vpop.f32.mrb[0].mxu0
      %849 = vmatprep.mubr.bf16.mxu0 0
      %850 = vmatmul.mubr.bf16.gmra.mrb[0].mxu0 %v796
      %v851 = vpop.f32.mrb[0].mxu0
      %v852 = vadd.f32 0.0, %v851
      %v853 = vpop.f32.mrb[0].mxu0
      %v854 = vpop.f32.mrb[0].mxu0
      %v855 = vadd.f32 0.0, %v854
      %v856 = vpop.f32.mrb[0].mxu0
      %857 = vmatprep.mubr.bf16.mxu0 0
      %858 = vmatmul.mubr.bf16.gmra.mrb[0].mxu0 %v799
      %v859 = vpop.f32.mrb[0].mxu0
      %v860 = vadd.f32 0.0, %v859
      %v861 = vpop.f32.mrb[0].mxu0
      %v862 = vpop.f32.mrb[0].mxu0
      %v863 = vadd.f32 0.0, %v862
      %v864 = vpop.f32.mrb[0].mxu0
      %865 = vdwg.mxu0
      %v866 = vadd.f32 %v632, %v836
      %v867 = vadd.f32 %v633, %v839
      %v868 = vadd.f32 %v634, %v844
      %v869 = vadd.f32 %v635, %v847
      %v870 = vadd.f32 %v636, %v852
      %v871 = vadd.f32 %v637, %v855
      %v872 = vadd.f32 %v638, %v860
      %v873 = vadd.f32 %v639, %v863
      %v874 = vadd.f32 %v866, %v867
      %v875 = vadd.f32 %v874, %v868
      %v876 = vadd.f32 %v875, %v869
      %v877 = vadd.f32 %v876, %v870
      %v878 = vadd.f32 %v877, %v871
      %v879 = vadd.f32 %v878, %v872
      %v880 = vadd.f32 %v879, %v873
      %v881 = vrot.slane %v880, 4
      %v882 = vadd.f32 %v880, %v881
      %v883 = vrot.slane %v882, 2
      %v884 = vadd.f32 %v882, %v883
      %v885 = vrot.slane %v884, 1
      %v886 = vadd.f32 %v884, %v885
      %v887 = vrcp.pop 64.0
      %v888 = vmul.f32 %v886, %v887
      %v889 = vmul.f32 %v866, %v866
      %v890 = vmul.f32 %v867, %v867
      %v891 = vmul.f32 %v868, %v868
      %v892 = vmul.f32 %v869, %v869
      %v893 = vmul.f32 %v870, %v870
      %v894 = vmul.f32 %v871, %v871
      %v895 = vmul.f32 %v872, %v872
      %v896 = vmul.f32 %v873, %v873
      %v897 = vadd.f32 %v889, %v890
      %v898 = vadd.f32 %v897, %v891
      %v899 = vadd.f32 %v898, %v892
      %v900 = vadd.f32 %v899, %v893
      %v901 = vadd.f32 %v900, %v894
      %v902 = vadd.f32 %v901, %v895
      %v903 = vadd.f32 %v902, %v896
      %v904 = vrot.slane %v903, 4
      %v905 = vadd.f32 %v903, %v904
      %v906 = vrot.slane %v905, 2
      %v907 = vadd.f32 %v905, %v906
      %v908 = vrot.slane %v907, 1
      %v909 = vadd.f32 %v907, %v908
      %v910 = vmul.f32 %v909, %v887
      %v911 = vmul.f32 %v888, %v888
      %v912 = vsub.f32 %v910, %v911
      %v913 = vmax.f32 %v912, 0.0
      %v914 = vsub.f32 %v866, %v888
      %v915 = vsub.f32 %v867, %v888
      %v916 = vsub.f32 %v868, %v888
      %v917 = vsub.f32 %v869, %v888
      %v918 = vsub.f32 %v870, %v888
      %v919 = vsub.f32 %v871, %v888
      %v920 = vsub.f32 %v872, %v888
      %v921 = vsub.f32 %v873, %v888
      %v922 = vadd.f32 %v913, 1e-05
      %v923 = vrsqrt.pop %v922
      %v924 = vmul.f32 %v914, %v923
      %v925 = vmul.f32 %v915, %v923
      %v926 = vmul.f32 %v916, %v923
      %v927 = vmul.f32 %v917, %v923
      %v928 = vmul.f32 %v918, %v923
      %v929 = vmul.f32 %v919, %v923
      %v930 = vmul.f32 %v920, %v923
      %v931 = vmul.f32 %v921, %v923
      %vm932 = vcmp.ge.f32.partialorder %v924, 0.0
      %vm933 = vcmp.ge.f32.partialorder %v925, 0.0
      %vm934 = vcmp.ge.f32.partialorder %v926, 0.0
      %vm935 = vcmp.ge.f32.partialorder %v927, 0.0
      %vm936 = vcmp.ge.f32.partialorder %v928, 0.0
      %vm937 = vcmp.ge.f32.partialorder %v929, 0.0
      %vm938 = vcmp.ge.f32.partialorder %v930, 0.0
      %vm939 = vcmp.ge.f32.partialorder %v931, 0.0
      %v940 = vmul.f32 %v924, 0.2
      %v941 = vmul.f32 %v925, 0.2
      %v942 = vmul.f32 %v926, 0.2
      %v943 = vmul.f32 %v927, 0.2
      %v944 = vmul.f32 %v928, 0.2
      %v945 = vmul.f32 %v929, 0.2
      %v946 = vmul.f32 %v930, 0.2
      %v947 = vmul.f32 %v931, 0.2
      %v948 = vsel %vm932, %v924, %v940
      %v949 = vsel %vm933, %v925, %v941
      %v950 = vsel %vm934, %v926, %v942
      %v951 = vsel %vm935, %v927, %v943
      %v952 = vsel %vm936, %v928, %v944
      %v953 = vsel %vm937, %v929, %v945
      %v954 = vsel %vm938, %v930, %v946
      %v955 = vsel %vm939, %v931, %v947
      %956 = vst [vmem:[%s180] sm:$0xff] %v948
      %957 = vst [vmem:[%s180 + $0x8] sm:$0xff] %v949
      %958 = vst [vmem:[%s180 + $0x10] sm:$0xff] %v950
      %959 = vst [vmem:[%s180 + $0x18] sm:$0xff] %v951
      %960 = vst [vmem:[%s180 + $0x20] sm:$0xff] %v952
      %961 = vst [vmem:[%s180 + $0x28] sm:$0xff] %v953
      %962 = vst [vmem:[%s180 + $0x30] sm:$0xff] %v954
      %963 = vst [vmem:[%s180 + $0x38] sm:$0xff] %v955
      %p964 = scmp.lt.s32.totalorder %s18, 1
      %s965 = scalar_select %p964, %s18, 1
      %p966 = scmp.lt.s32.totalorder %s17, 0
      %s967 = scalar_select %p966, %s17, 0
      %s968 = smul.addr %s965, 8
      %s969 = sadd.s32 %s967, %s968
      %s970 = smul.addr %s969, 8
      %s971 = scalar_lea.vmem %s2, %s970
      // Predicated region
      $region29: #{unet_down.1} parent=27 // pred_check
        %p972 = pneg %p97
      $region30: #{unet_down.1} parent=27 // pred_check_branch
        %974 = sbr.rel (%p972) target = $region32
      $region31: #{unet_down.1} parent=27 // pred_region
        _
      $region32: #{unet_down.1} parent=27 // pred_fallthru
        _
    $region28: #{unet_down.1} parent=5 // pred_fallthru
      _
    %p975 = scmp.le.s32.totalorder 2, %s8
    // Predicated region
    $region33: #{unet_down.1} parent=5 // pred_check
      %p976 = pneg %p975
    $region34: #{unet_down.1} parent=5 // pred_check_branch
      %978 = sbr.rel (%p976) target = $region36
    $region35: #{unet_down.1} parent=5 // pred_region
      %s979 = ssub.s32 %s8, 2
      // Predicated region
      $region37: #{unet_down.1} parent=35 // pred_check
        %p980 = pneg %p103
      $region38: #{unet_down.1} parent=35 // pred_check_branch
        %982 = sbr.rel (%p980) target = $region40
      $region39: #{unet_down.1} parent=35 // pred_region
        %p983 = scmp.lt.s32.totalorder %s20, 1
        %s984 = scalar_select %p983, %s20, 1
        %p985 = scmp.lt.s32.totalorder %s19, 0
        %s986 = scalar_select %p985, %s19, 0
        %s987 = smul.addr %s984, 8
        %s988 = sadd.s32 %s986, %s987
        %s989 = smul.addr %s988, 8
        %s990 = scalar_lea.vmem %s2, %s989
      $region40: #{unet_down.1} parent=35 // pred_fallthru
        _
    $region36: #{unet_down.1} parent=5 // pred_fallthru
      _
  $region6: #{unet_down.1} parent=0 // loop_footer
    %s12 = sadd.s32 1, %s8
  $region7: #{unet_down.1} parent=0 // loop_footer_branch
    %7 = sbr.rel target = $region3
  $region8: #{unet_down.1} parent=0 // loop_exit
    _

</llo_original>
